<compile_context>
chip_gen: v5e
topology: v5e:2x2
jax: 0.10.0
libtpu: 0.0.40
codegen_flags: <defaults>
</compile_context>

<pallas_src>
import jax
import jax.numpy as jnp
from jax import lax
from jax.experimental import pallas as pl
from jax.experimental.pallas import tpu as pltpu


def _coeffnet_kernel(tT_ref, w1T_ref, b1T_ref, w2_ref, b2_ref, o_ref):
    """One batch tile: hT = relu(w1T @ tT + b1T); o = hT^T @ w2 + b2."""
    tT = tT_ref[...]                      # [in_dim, TB]  (batch on the lane axis)
    w1T = w1T_ref[...]                    # [H, in_dim]
    if w1T.shape[1] == 1:
        # in_dim == 1: the first layer is an outer product; a VPU broadcast
        # multiply beats pushing a K=1 contraction through the MXU.
        hT = w1T * tT                     # [H,1] * [1,TB] -> [H,TB]
    else:
        hT = jnp.dot(w1T, tT, preferred_element_type=jnp.float32)   # [H,TB]
    hT = jnp.maximum(hT + b1T_ref[...], 0.0)          # bias [H,1] lane-broadcasts
    # Second layer on the MXU, transposed-LHS contraction over H:
    #   o[b, n] = sum_h hT[h, b] * w2[h, n]  -> [TB, out_dim]
    o = lax.dot_general(hT, w2_ref[...],
                        dimension_numbers=(((0,), (0,)), ((), ())),
                        preferred_element_type=jnp.float32)
    o_ref[...] = (o + b2_ref[...]).astype(o_ref.dtype)  # bias [1,out] broadcasts


def prepare_params(w1, b1, w2, b2):
    """One-time conversion from math layout (w1:[in,H], b1:[H], w2:[H,out],
    b2:[out]) to the kernel layout. Keep the pallas_call as the only HBM
    traffic in the hot path."""
    in_dim, hidden = w1.shape
    out_dim = w2.shape[1]
    return (jnp.asarray(w1).T.reshape(hidden, in_dim),
            jnp.asarray(b1).reshape(hidden, 1),
            jnp.asarray(w2).reshape(hidden, out_dim),
            jnp.asarray(b2).reshape(1, out_dim))


def coefficient_net_forward(t, params, *, block_rows=4096):
    """t: [B, in_dim] float32 -> [B, out_dim] float32."""
    w1T, b1T, w2, b2 = params
    B, in_dim = t.shape
    H = w1T.shape[0]
    out_dim = w2.shape[1]
    assert w1T.shape == (H, in_dim) and b1T.shape == (H, 1)
    assert w2.shape == (H, out_dim) and b2.shape == (1, out_dim)

    # Batch along lanes: [in_dim, B] is lane-dense. For in_dim == 1 this
    # transpose is a free degenerate-dim reshape (no HBM copy).
    tT = t.T

    # Batch tile selection:
    #  * small B: a single block whose dims equal the full array dims
    #    (satisfies the (8,128) block rule for any B).
    #  * large B: a big 128-aligned tile so grid-step overhead amortizes and
    #    the batch grid shards across the two v7x TensorCores. The ragged last
    #    tile is handled by Pallas boundary masking (OOB writes are dropped).
    if B <= block_rows:
        tb = B
        grid = (1,)
    else:
        tb = max(128, (block_rows // 128) * 128)
        grid = (pl.cdiv(B, tb),)

    return pl.pallas_call(
        _coeffnet_kernel,
        out_shape=jax.ShapeDtypeStruct((B, out_dim), jnp.float32),
        grid=grid,
        in_specs=[
            pl.BlockSpec((in_dim, tb), lambda i: (0, i)),   # activations: batch-tiled
            pl.BlockSpec((H, in_dim), lambda i: (0, 0)),    # params stay VMEM-resident
            pl.BlockSpec((H, 1), lambda i: (0, 0)),
            pl.BlockSpec((H, out_dim), lambda i: (0, 0)),
            pl.BlockSpec((1, out_dim), lambda i: (0, 0)),
        ],
        out_specs=pl.BlockSpec((tb, out_dim), lambda i: (i, 0)),
        compiler_params=pltpu.CompilerParams(
            dimension_semantics=("parallel",),
            vmem_limit_bytes=32 * 1024 * 1024,
        ),
    )(tT, w1T, b1T, w2, b2)


def init_params(key, input_dim=1, hidden_dim=64, output_dim=10):
    """Deterministic init mimicking PyTorch's default nn.Linear init
    (uniform in [-1/sqrt(fan_in), 1/sqrt(fan_in)]). Math layout."""
    k1, k2, k3, k4 = jax.random.split(key, 4)
    bnd1 = 1.0 / jnp.sqrt(jnp.float32(input_dim))
    bnd2 = 1.0 / jnp.sqrt(jnp.float32(hidden_dim))
    w1 = jax.random.uniform(k1, (input_dim, hidden_dim), jnp.float32, -bnd1, bnd1)
    b1 = jax.random.uniform(k2, (hidden_dim,), jnp.float32, -bnd1, bnd1)
    w2 = jax.random.uniform(k3, (hidden_dim, output_dim), jnp.float32, -bnd2, bnd2)
    b2 = jax.random.uniform(k4, (output_dim,), jnp.float32, -bnd2, bnd2)
    return w1, b1, w2, b2


def reference_forward(t, w1, b1, w2, b2):
    h = jnp.maximum(t @ w1 + b1, 0.0)
    return h @ w2 + b2


if __name__ == "__main__":
    key = jax.random.PRNGKey(0)
    k_t, k_p, k_t2, k_p2 = jax.random.split(key, 4)

    # Default CoefficientNet shapes: Linear(1 -> 64) -> ReLU -> Linear(64 -> 10).
    batch, input_dim, hidden_dim, output_dim = 8, 1, 64, 10
    t = jax.random.uniform(k_t, (batch, input_dim), jnp.float32)
    w1, b1, w2, b2 = init_params(k_p, input_dim, hidden_dim, output_dim)
    params = prepare_params(w1, b1, w2, b2)

    out = coefficient_net_forward(t, params)
    jax.block_until_ready(out)
    ref = reference_forward(t, w1, b1, w2, b2)
    assert out.shape == (batch, output_dim)
    assert jnp.allclose(out, ref, atol=1e-5, rtol=1e-5)

    # Multi-step grid with a ragged last tile (no padding, no post-kernel slice).
    big_t = jax.random.uniform(k_t2, (1337, input_dim), jnp.float32)
    big_out = coefficient_net_forward(big_t, params, block_rows=256)
    jax.block_until_ready(big_out)
    big_ref = reference_forward(big_t, w1, b1, w2, b2)
    assert big_out.shape == (1337, output_dim)
    assert jnp.allclose(big_out, big_ref, atol=1e-5, rtol=1e-5)

    # in_dim > 1 exercises the MXU path of the first layer.
    w1b, b1b, w2b, b2b = init_params(k_p2, 3, hidden_dim, output_dim)
    params_b = prepare_params(w1b, b1b, w2b, b2b)
    t3 = jax.random.uniform(k_t, (37, 3), jnp.float32)
    out3 = coefficient_net_forward(t3, params_b)
    jax.block_until_ready(out3)
    ref3 = reference_forward(t3, w1b, b1b, w2b, b2b)
    assert out3.shape == (37, output_dim)
    assert jnp.allclose(out3, ref3, atol=1e-5, rtol=1e-5)

    print("KERNEL_OK")
</pallas_src>

<mosaic_0001>
module attributes {stable_mosaic.version = 11 : i64} {
  func.func @_coeffnet_kernel(%arg0: i32, %arg1: memref<1x8xf32, #tpu.memory_space<vmem>>, %arg2: memref<64x1xf32, #tpu.memory_space<vmem>>, %arg3: memref<64x1xf32, #tpu.memory_space<vmem>>, %arg4: memref<64x10xf32, #tpu.memory_space<vmem>>, %arg5: memref<1x10xf32, #tpu.memory_space<vmem>>, %arg6: memref<8x10xf32, #tpu.memory_space<vmem>>) attributes {dimension_semantics = [#tpu.dimension_semantics<parallel>], iteration_bounds = array<i64: 1>, scalar_prefetch = 0 : i64, scratch_operands = 0 : i64, tpu.core_type = #tpu.core_type<tc>, window_params = [{transform_indices = @transform_0, window_bounds = array<i64: 1, 8>}, {pipeline_mode = #tpu.pipeline_mode<synchronous>, transform_indices = @transform_1, window_bounds = array<i64: 64, 1>}, {pipeline_mode = #tpu.pipeline_mode<synchronous>, transform_indices = @transform_2, window_bounds = array<i64: 64, 1>}, {pipeline_mode = #tpu.pipeline_mode<synchronous>, transform_indices = @transform_3, window_bounds = array<i64: 64, 10>}, {pipeline_mode = #tpu.pipeline_mode<synchronous>, transform_indices = @transform_4, window_bounds = array<i64: 1, 10>}, {transform_indices = @transform_5, window_bounds = array<i64: 8, 10>}]} {
    %c0 = arith.constant 0 : index
    %c0_0 = arith.constant 0 : index
    %0 = vector.load %arg1[%c0, %c0_0] : memref<1x8xf32, #tpu.memory_space<vmem>>, vector<1x8xf32>
    %c0_1 = arith.constant 0 : index
    %c0_2 = arith.constant 0 : index
    %1 = vector.load %arg2[%c0_1, %c0_2] : memref<64x1xf32, #tpu.memory_space<vmem>>, vector<64x1xf32>
    %2 = vector.broadcast %1 : vector<64x1xf32> to vector<64x8xf32>
    %3 = vector.broadcast %0 : vector<1x8xf32> to vector<64x8xf32>
    %4 = arith.mulf %2, %3 : vector<64x8xf32>
    %c0_3 = arith.constant 0 : index
    %c0_4 = arith.constant 0 : index
    %5 = vector.load %arg3[%c0_3, %c0_4] : memref<64x1xf32, #tpu.memory_space<vmem>>, vector<64x1xf32>
    %6 = vector.broadcast %5 : vector<64x1xf32> to vector<64x8xf32>
    %7 = arith.addf %4, %6 : vector<64x8xf32>
    %cst = arith.constant 0.000000e+00 : f32
    %8 = vector.broadcast %cst : f32 to vector<64x8xf32>
    %9 = arith.maximumf %7, %8 : vector<64x8xf32>
    %c0_5 = arith.constant 0 : index
    %c0_6 = arith.constant 0 : index
    %10 = vector.load %arg4[%c0_5, %c0_6] : memref<64x10xf32, #tpu.memory_space<vmem>>, vector<64x10xf32>
    %cst_7 = arith.constant dense<0.000000e+00> : vector<8x10xf32>
    %11 = tpu.matmul %9, %10, %cst_7 {dimension_numbers = #tpu.dot_dimension_numbers<[0], [0], [1], [1], [0, 1, 1, 1], [], []>} : vector<64x8xf32>, vector<64x10xf32>, vector<8x10xf32> -> vector<8x10xf32>
    %c0_8 = arith.constant 0 : index
    %c0_9 = arith.constant 0 : index
    %12 = vector.load %arg5[%c0_8, %c0_9] : memref<1x10xf32, #tpu.memory_space<vmem>>, vector<1x10xf32>
    %13 = vector.broadcast %12 : vector<1x10xf32> to vector<8x10xf32>
    %14 = arith.addf %11, %13 : vector<8x10xf32>
    %c0_10 = arith.constant 0 : index
    %c0_11 = arith.constant 0 : index
    %15 = vector.load %arg6[%c0_10, %c0_11] : memref<8x10xf32, #tpu.memory_space<vmem>>, vector<8x10xf32>
    tpu.vector_store %arg6[%c0_10, %c0_11], %14 {strides = array<i32>} : memref<8x10xf32, #tpu.memory_space<vmem>>, vector<8x10xf32>,
    return
  }
  func.func @transform_0(%arg0: i32) -> (i32, i32) {
    %c0_i32 = arith.constant 0 : i32
    %c0_i32_0 = arith.constant 0 : i32
    return %c0_i32, %arg0 : i32, i32
  }
  func.func @transform_1(%arg0: i32) -> (i32, i32) {
    %c0_i32 = arith.constant 0 : i32
    %c0_i32_0 = arith.constant 0 : i32
    %c0_i32_1 = arith.constant 0 : i32
    return %c0_i32, %c0_i32_0 : i32, i32
  }
  func.func @transform_2(%arg0: i32) -> (i32, i32) {
    %c0_i32 = arith.constant 0 : i32
    %c0_i32_0 = arith.constant 0 : i32
    %c0_i32_1 = arith.constant 0 : i32
    return %c0_i32, %c0_i32_0 : i32, i32
  }
  func.func @transform_3(%arg0: i32) -> (i32, i32) {
    %c0_i32 = arith.constant 0 : i32
    %c0_i32_0 = arith.constant 0 : i32
    %c0_i32_1 = arith.constant 0 : i32
    return %c0_i32, %c0_i32_0 : i32, i32
  }
  func.func @transform_4(%arg0: i32) -> (i32, i32) {
    %c0_i32 = arith.constant 0 : i32
    %c0_i32_0 = arith.constant 0 : i32
    %c0_i32_1 = arith.constant 0 : i32
    return %c0_i32, %c0_i32_0 : i32, i32
  }
  func.func @transform_5(%arg0: i32) -> (i32, i32) {
    %c0_i32 = arith.constant 0 : i32
    %c0_i32_0 = arith.constant 0 : i32
    return %arg0, %c0_i32 : i32, i32
  }
}

</mosaic_0001>

<llo_original>
// kernel: tpu_custom_call.1
$region0: #{tpu_custom_call.1}
  #allocation0 [shape = 'u32[]', space=smem, size = 0x4, offset = 0x4, fixed_abs, tag = 'smem constant byte address 0x4 - core index']
  #allocation1 [shape = 'u32[72,128]{1,0:T(1,128)}', space=vmem, size = 0x9000, scoped, tag = 'internal scratch']
  %s0 = inlined_call_operand.vmem [shape: f32[1,8], index: 0, kind: input, shape index: {}]
  %s1 = inlined_call_operand.vmem [shape: f32[64,1], index: 1, kind: input, shape index: {}]
  %s2 = inlined_call_operand.vmem [shape: f32[64,1], index: 2, kind: input, shape index: {}]
  %s3 = inlined_call_operand.vmem [shape: f32[64,10], index: 3, kind: input, shape index: {}]
  %s4 = inlined_call_operand.vmem [shape: f32[1,10], index: 4, kind: input, shape index: {}]
  %s5 = inlined_call_operand.hbm [shape: f32[8,10], index: 5, kind: output, shape index: {}]
  %s6 = sld [smem:[#allocation0]]
  $region30: #{tpu_custom_call.1} parent=0
    _
  %s8 = ssub.s32 1, %s6
  %s9 = scalar_select 0, %s8, %s6
  $region1: #{tpu_custom_call.1} parent=0
    #allocation2 [shape = 'u8[4096]{0}', space=vmem, size = 0x1000, scoped, tag = 'output window, operand 0, single buffered']
    #allocation3 [shape = 's32[1]{0}', space=sflag, size = 0x4, scoped, tag = 'scoped memory for tpu_custom_call.1']
    %10 = vsyncpa [#allocation3], 0
    // Predicated region
    $region2: #{tpu_custom_call.1} parent=1 // pred_check
      _
    $region3: #{tpu_custom_call.1} parent=1 // pred_check_branch
      %12 = sbr.rel (0) target = $region5
    $region4: #{tpu_custom_call.1} parent=1 // pred_region
      _
    $region5: #{tpu_custom_call.1} parent=1 // pred_fallthru
      _
    // Predicated region
    $region6: #{tpu_custom_call.1} parent=1 // pred_check
      _
    $region7: #{tpu_custom_call.1} parent=1 // pred_check_branch
      %14 = sbr.rel (0) target = $region9
    $region8: #{tpu_custom_call.1} parent=1 // pred_region
      _
    $region9: #{tpu_custom_call.1} parent=1 // pred_fallthru
      _
    // Predicated region
    $region10: #{tpu_custom_call.1} parent=1 // pred_check
      _
    $region11: #{tpu_custom_call.1} parent=1 // pred_check_branch
      %16 = sbr.rel (0) target = $region13
    $region12: #{tpu_custom_call.1} parent=1 // pred_region
      _
    $region13: #{tpu_custom_call.1} parent=1 // pred_fallthru
      _
    // Predicated region
    $region14: #{tpu_custom_call.1} parent=1 // pred_check
      _
    $region15: #{tpu_custom_call.1} parent=1 // pred_check_branch
      %18 = sbr.rel (0) target = $region17
    $region16: #{tpu_custom_call.1} parent=1 // pred_region
      _
    $region17: #{tpu_custom_call.1} parent=1 // pred_fallthru
      _
    // Predicated region
    $region18: #{tpu_custom_call.1} parent=1 // pred_check
      _
    $region19: #{tpu_custom_call.1} parent=1 // pred_check_branch
      %20 = sbr.rel (0) target = $region21
    $region20: #{tpu_custom_call.1} parent=1 // pred_region
      _
    $region21: #{tpu_custom_call.1} parent=1 // pred_fallthru
      _
    %v21 = vld [vmem:[%s0] sm:$0x1]
    %v22 = vld [vmem:[%s1] sm:$0xff]
    %v23 = vld [vmem:[%s1 + $0x8] sm:$0xff]
    %v24 = vld [vmem:[%s1 + $0x10] sm:$0xff]
    %v25 = vld [vmem:[%s1 + $0x18] sm:$0xff]
    %v26 = vld [vmem:[%s1 + $0x20] sm:$0xff]
    %v27 = vld [vmem:[%s1 + $0x28] sm:$0xff]
    %v28 = vld [vmem:[%s1 + $0x30] sm:$0xff]
    %v29 = vld [vmem:[%s1 + $0x38] sm:$0xff]
    %31 = vset.pattern.permute.xlu0 0
    %32 = vperm.xlu0 %31, %v22
    %v33 = vpop.permute.xlu0 %32
    %36 = vset.pattern.permute.xlu0 0
    %37 = vperm.xlu0 %36, %v23
    %v38 = vpop.permute.xlu0 %37
    %41 = vset.pattern.permute.xlu0 0
    %42 = vperm.xlu0 %41, %v24
    %v43 = vpop.permute.xlu0 %42
    %46 = vset.pattern.permute.xlu0 0
    %47 = vperm.xlu0 %46, %v25
    %v48 = vpop.permute.xlu0 %47
    %51 = vset.pattern.permute.xlu0 0
    %52 = vperm.xlu0 %51, %v26
    %v53 = vpop.permute.xlu0 %52
    %56 = vset.pattern.permute.xlu0 0
    %57 = vperm.xlu0 %56, %v27
    %v58 = vpop.permute.xlu0 %57
    %61 = vset.pattern.permute.xlu0 0
    %62 = vperm.xlu0 %61, %v28
    %v63 = vpop.permute.xlu0 %62
    %66 = vset.pattern.permute.xlu0 0
    %67 = vperm.xlu0 %66, %v29
    %v68 = vpop.permute.xlu0 %67
    %v71 = vperm.slane %v21, 0
    %v73 = vmul.f32 %v33, %v71
    %v74 = vmul.f32 %v38, %v71
    %v75 = vmul.f32 %v43, %v71
    %v76 = vmul.f32 %v48, %v71
    %v77 = vmul.f32 %v53, %v71
    %v78 = vmul.f32 %v58, %v71
    %v79 = vmul.f32 %v63, %v71
    %v80 = vmul.f32 %v68, %v71
    %v81 = vld [vmem:[%s2] sm:$0xff]
    %v82 = vld [vmem:[%s2 + $0x8] sm:$0xff]
    %v83 = vld [vmem:[%s2 + $0x10] sm:$0xff]
    %v84 = vld [vmem:[%s2 + $0x18] sm:$0xff]
    %v85 = vld [vmem:[%s2 + $0x20] sm:$0xff]
    %v86 = vld [vmem:[%s2 + $0x28] sm:$0xff]
    %v87 = vld [vmem:[%s2 + $0x30] sm:$0xff]
    %v88 = vld [vmem:[%s2 + $0x38] sm:$0xff]
    %90 = vset.pattern.permute.xlu0 0
    %91 = vperm.xlu0 %90, %v81
    %v92 = vpop.permute.xlu0 %91
    %95 = vset.pattern.permute.xlu0 0
    %96 = vperm.xlu0 %95, %v82
    %v97 = vpop.permute.xlu0 %96
    %100 = vset.pattern.permute.xlu0 0
    %101 = vperm.xlu0 %100, %v83
    %v102 = vpop.permute.xlu0 %101
    %105 = vset.pattern.permute.xlu0 0
    %106 = vperm.xlu0 %105, %v84
    %v107 = vpop.permute.xlu0 %106
    %110 = vset.pattern.permute.xlu0 0
    %111 = vperm.xlu0 %110, %v85
    %v112 = vpop.permute.xlu0 %111
    %115 = vset.pattern.permute.xlu0 0
    %116 = vperm.xlu0 %115, %v86
    %v117 = vpop.permute.xlu0 %116
    %120 = vset.pattern.permute.xlu0 0
    %121 = vperm.xlu0 %120, %v87
    %v122 = vpop.permute.xlu0 %121
    %125 = vset.pattern.permute.xlu0 0
    %126 = vperm.xlu0 %125, %v88
    %v127 = vpop.permute.xlu0 %126
    %v129 = vadd.f32 %v73, %v92
    %v130 = vadd.f32 %v74, %v97
    %v131 = vadd.f32 %v75, %v102
    %v132 = vadd.f32 %v76, %v107
    %v133 = vadd.f32 %v77, %v112
    %v134 = vadd.f32 %v78, %v117
    %v135 = vadd.f32 %v79, %v122
    %v136 = vadd.f32 %v80, %v127
    %v137 = vmax.f32 %v129, 0.0
    %v138 = vmax.f32 %v130, 0.0
    %v139 = vmax.f32 %v131, 0.0
    %v140 = vmax.f32 %v132, 0.0
    %v141 = vmax.f32 %v133, 0.0
    %v142 = vmax.f32 %v134, 0.0
    %v143 = vmax.f32 %v135, 0.0
    %v144 = vmax.f32 %v136, 0.0
    %v145 = vld [vmem:[%s3] sm:$0xff]
    %v146 = vld [vmem:[%s3 + $0x8] sm:$0xff]
    %v147 = vld [vmem:[%s3 + $0x10] sm:$0xff]
    %v148 = vld [vmem:[%s3 + $0x18] sm:$0xff]
    %v149 = vld [vmem:[%s3 + $0x20] sm:$0xff]
    %v150 = vld [vmem:[%s3 + $0x28] sm:$0xff]
    %v151 = vld [vmem:[%s3 + $0x30] sm:$0xff]
    %v152 = vld [vmem:[%s3 + $0x38] sm:$0xff]
    %v153 = vld [vmem:[%s4] sm:$0x1]
    %v155 = vperm.slane %v153, 0
    %157 = vxpose.xlu0.b32.start [1/16] %v137, 128
    %158 = vxpose.xlu0.b32.cont [2/16] %v138, 128
    %159 = vxpose.xlu0.b32.cont [3/16] %v139, 128
    %160 = vxpose.xlu0.b32.cont [4/16] %v140, 128
    %161 = vxpose.xlu0.b32.cont [5/16] %v141, 128
    %162 = vxpose.xlu0.b32.cont [6/16] %v142, 128
    %163 = vxpose.xlu0.b32.cont [7/16] %v143, 128
    %164 = vxpose.xlu0.b32.cont [8/16] %v144, 128
    %165 = vxpose.xlu0.b32.cont [9/16] 0.0, 128
    %166 = vxpose.xlu0.b32.cont [10/16] 0.0, 128
    %167 = vxpose.xlu0.b32.cont [11/16] 0.0, 128
    %168 = vxpose.xlu0.b32.cont [12/16] 0.0, 128
    %169 = vxpose.xlu0.b32.cont [13/16] 0.0, 128
    %170 = vxpose.xlu0.b32.cont [14/16] 0.0, 128
    %171 = vxpose.xlu0.b32.cont [15/16] 0.0, 128
    %172 = vxpose.xlu0.b32.end [16/16] 0.0, 128
    %v173 = vpop.trf.xlu0
    %v174 = vpop.trf.xlu0
    %v175 = vpop.trf.xlu0
    %v176 = vpop.trf.xlu0
    %v177 = vpop.trf.xlu0
    %v178 = vpop.trf.xlu0
    %v179 = vpop.trf.xlu0
    %v180 = vpop.trf.xlu0
    %v181 = vpop.trf.xlu0
    %v182 = vpop.trf.xlu0
    %v183 = vpop.trf.xlu0
    %v184 = vpop.trf.xlu0
    %v185 = vpop.trf.xlu0
    %v186 = vpop.trf.xlu0
    %v187 = vpop.trf.xlu0
    %v188 = vpop.trf.xlu0
    %vm189 = vcmask 523264
    %v191 = vsel %vm189, %v173, 0
    %193 = vmatpush.msra.mxu0 0.0
    %194 = vmatpush.msra.mxu0 0.0
    %195 = vmatpush.msra.mxu0 0.0
    %196 = vmatpush.msra.mxu0 0.0
    %197 = vmatpush.msra.mxu0 0.0
    %198 = vmatpush.msra.mxu0 0.0
    %199 = vmatpush.msra.mxu0 0.0
    %200 = vmatpush.msra.mxu0 0.0
    %201 = vmatpush.msra.mxu0 %v152
    %202 = vmatpush.msra.mxu0 %v151
    %203 = vmatpush.msra.mxu0 %v150
    %204 = vmatpush.msra.mxu0 %v149
    %205 = vmatpush.msra.mxu0 %v148
    %206 = vmatpush.msra.mxu0 %v147
    %207 = vmatpush.msra.mxu0 %v146
    %208 = vmatpush.msra.mxu0 %v145
    %209 = vmatmul.f32.gmra.mxu0 %v191
    %v210 = vpop.f32.mrf.mxu0
    %v211 = vadd.f32 %v155, %v210
    %212 = vdwg.mxu0
    %vm213 = vcmask 80896
    %214 = vst.msk [vmem:[#allocation2] sm:$0xff] %vm213, %v211
    // Predicated region
    $region22: #{tpu_custom_call.1} parent=1 // pred_check
      _
    $region23: #{tpu_custom_call.1} parent=1 // pred_check_branch
      %216 = sbr.rel (0) target = $region25
    $region24: #{tpu_custom_call.1} parent=1 // pred_region
      %218 = vsyncadd [#allocation3], 0
      %s220 = sshll.u32 [#allocation2], 4
      %s221 = int_to_ptr.vmem [resolvable:$true] %s220
      %s222 = sshll.u32 %s5, 4
      %s223 = int_to_ptr.hbm [resolvable:$true] %s222
      %225 = dma.vmem_to_hbm [thread:$0]  %s221, 128, %s223, [#allocation3]
    $region25: #{tpu_custom_call.1} parent=1 // pred_fallthru
      _
    // Predicated region
    $region26: #{tpu_custom_call.1} parent=1 // pred_check
      _
    $region27: #{tpu_custom_call.1} parent=1 // pred_check_branch
      %227 = sbr.rel (0) target = $region29
    $region28: #{tpu_custom_call.1} parent=1 // pred_region
      %229 = dma.done [#allocation3], 128
    $region29: #{tpu_custom_call.1} parent=1 // pred_fallthru
      _
    %230 = vsyncpa [#allocation3], 1

</llo_original>
